<compile_context>
chip_gen: v5e
topology: v5e:2x2
jax: 0.10.0
libtpu: 0.0.40
codegen_flags: <defaults>
</compile_context>

<pallas_src>
import functools

import jax
import jax.numpy as jnp
from jax import lax
from jax.experimental import pallas as pl
from jax.experimental.pallas import tpu as pltpu


# ---------------------------------------------------------------------------
# Kernel 1: conv as a single im2col matmul + per-program partial BN statistics
# ---------------------------------------------------------------------------
def _conv_stats_kernel(wt_ref, p_ref, y_ref, psum_ref, psq_ref):
    # wt_ref : (Coutp, K)        weights, K = KH*KW*Cin (compute dtype)
    # p_ref  : (1, K, tm)        im2col patches, spatial on the lane axis
    # y_ref  : (1, Coutp, tm)    f32 conv output tile (lane-dense)
    # psum_ref/psq_ref : (1, 1, Coutp, 1)  per-program partial sums (no races)
    acc = jnp.dot(wt_ref[...], p_ref[0],
                  preferred_element_type=jnp.float32)          # one MXU dot
    y_ref[0] = acc.astype(y_ref.dtype)
    psum_ref[0, 0] = jnp.sum(acc, axis=1, keepdims=True)       # (Coutp, 1)
    psq_ref[0, 0] = jnp.sum(acc * acc, axis=1, keepdims=True)  # (Coutp, 1)


# ---------------------------------------------------------------------------
# Kernel 2: fused batchnorm (pre-folded scale/bias) + ReLU, in place on conv_out
# ---------------------------------------------------------------------------
def _bn_relu_kernel(y_ref, scale_ref, bias_ref, o_ref):
    # y_ref: (1, Coutp, tm) f32 ; scale/bias: (Coutp, 1) f32
    y = y_ref[0]
    o_ref[0] = jnp.maximum(y * scale_ref[...] + bias_ref[...], 0.0).astype(o_ref.dtype)


def _round_up(x, m):
    return (x + m - 1) // m * m


def _pick_spatial_tile(hwp, k_elems, coutp, in_bytes, vmem_budget=8 << 20):
    """Largest multiple of 128 dividing hwp whose double-buffered working set
    (patch tile + f32 output tile) fits the VMEM budget."""
    per_lane_bytes = 2 * (k_elems * in_bytes + coutp * 4)      # 2x: double buffer
    cap = (vmem_budget // max(1, per_lane_bytes)) // 128 * 128
    cap = max(128, min(2048, cap))
    best, t = 128, 128
    while t <= min(hwp, cap):
        if hwp % t == 0:
            best = t
        t += 128
    return best


@functools.partial(jax.jit,
                   static_argnames=("stride", "padding", "eps", "compute_dtype"))
def cnn_block_forward(x_nchw, weight_oihw, gamma, beta, *,
                      stride=1, padding=0, eps=1e-5,
                      compute_dtype=jnp.float32):
    N, Cin, H, W = x_nchw.shape
    Cout, _, KH, KW = weight_oihw.shape

    x = x_nchw.astype(jnp.float32)
    if padding:
        x = jnp.pad(x, ((0, 0), (0, 0), (padding, padding), (padding, padding)))
    Hp, Wp = H + 2 * padding, W + 2 * padding
    Ho = (Hp - KH) // stride + 1
    Wo = (Wp - KW) // stride + 1
    HW = Ho * Wo
    K = KH * KW * Cin

    # ---- glue: im2col (layout plumbing, not compute) ------------------------
    # patches[n, (kh*KW + kw)*Cin + cin, ho*Wo + wo] = x[n, cin, ho*s+kh, wo*s+kw]
    cols = [x[:, :, kh:kh + stride * Ho:stride, kw:kw + stride * Wo:stride]
            for kh in range(KH) for kw in range(KW)]           # each (N, Cin, Ho, Wo)
    patches = jnp.stack(cols, axis=1).reshape(N, K, HW)

    # pad spatial axis to a lane multiple; zero columns contribute 0 to stats
    HWp = _round_up(HW, 128)
    if HWp != HW:
        patches = jnp.pad(patches, ((0, 0), (0, 0), (0, HWp - HW)))
    # pad Cout to a sublane multiple; zero rows of W give zero outputs (sliced off)
    Coutp = _round_up(Cout, 8)

    tm = _pick_spatial_tile(HWp, K, Coutp, jnp.dtype(compute_dtype).itemsize)
    S = HWp // tm

    patches = patches.astype(compute_dtype)
    # weight as (Coutp, K) with K ordered (kh, kw, cin) to match the patches
    w_t = jnp.transpose(weight_oihw, (0, 2, 3, 1)).reshape(Cout, K)
    if Coutp != Cout:
        w_t = jnp.pad(w_t, ((0, Coutp - Cout), (0, 0)))
    w_t = w_t.astype(compute_dtype)

    # ---- kernel 1: conv matmul + per-program partial channel stats ----------
    conv_out, psum, psq = pl.pallas_call(
        _conv_stats_kernel,
        out_shape=(jax.ShapeDtypeStruct((N, Coutp, HWp), jnp.float32),
                   jax.ShapeDtypeStruct((N, S, Coutp, 1), jnp.float32),
                   jax.ShapeDtypeStruct((N, S, Coutp, 1), jnp.float32)),
        grid_spec=pltpu.PrefetchScalarGridSpec(
            num_scalar_prefetch=0, grid=(N, S),
            in_specs=[pl.BlockSpec((Coutp, K), lambda n, s: (0, 0)),
                      pl.BlockSpec((1, K, tm), lambda n, s: (n, 0, s))],
            out_specs=(pl.BlockSpec((1, Coutp, tm), lambda n, s: (n, 0, s)),
                       pl.BlockSpec((1, 1, Coutp, 1), lambda n, s: (n, s, 0, 0)),
                       pl.BlockSpec((1, 1, Coutp, 1), lambda n, s: (n, s, 0, 0)))),
        compiler_params=pltpu.CompilerParams(
            dimension_semantics=("parallel", "parallel")),
    )(w_t, patches)

    # ---- glue: finish the tiny (N*S, Coutp) stats reduction, fold BN affine -
    count = float(N * HW)
    mean = jnp.sum(psum, axis=(0, 1)) / count                  # (Coutp, 1)
    var = jnp.sum(psq, axis=(0, 1)) / count - mean * mean      # biased, as in BN fwd
    g = gamma.astype(jnp.float32).reshape(Cout, 1)
    b = beta.astype(jnp.float32).reshape(Cout, 1)
    if Coutp != Cout:
        g = jnp.pad(g, ((0, Coutp - Cout), (0, 0)), constant_values=1.0)
        b = jnp.pad(b, ((0, Coutp - Cout), (0, 0)))
    scale = g * lax.rsqrt(var + eps)
    bias = b - mean * scale

    # ---- kernel 2: normalize + affine + ReLU, in place on conv_out ----------
    out = pl.pallas_call(
        _bn_relu_kernel,
        out_shape=jax.ShapeDtypeStruct((N, Coutp, HWp), jnp.float32),
        grid_spec=pltpu.PrefetchScalarGridSpec(
            num_scalar_prefetch=0, grid=(N, S),
            in_specs=[pl.BlockSpec((1, Coutp, tm), lambda n, s: (n, 0, s)),
                      pl.BlockSpec((Coutp, 1), lambda n, s: (0, 0)),
                      pl.BlockSpec((Coutp, 1), lambda n, s: (0, 0))],
            out_specs=pl.BlockSpec((1, Coutp, tm), lambda n, s: (n, 0, s))),
        compiler_params=pltpu.CompilerParams(
            dimension_semantics=("parallel", "parallel")),
        input_output_aliases={0: 0},
    )(conv_out, scale, bias)

    # drop channel/spatial padding; (N, Cout, Ho*Wo) -> NCHW is a free reshape
    return out[:, :Cout, :HW].reshape(N, Cout, Ho, Wo)


def _reference(x_nchw, weight_oihw, gamma, beta, *, stride, padding, eps):
    """Pure-JAX reference matching PyTorch CNNBlock.forward (train-mode BN)."""
    y = lax.conv_general_dilated(
        x_nchw, weight_oihw, window_strides=(stride, stride),
        padding=[(padding, padding), (padding, padding)],
        dimension_numbers=("NCHW", "OIHW", "NCHW"))
    mean = jnp.mean(y, axis=(0, 2, 3), keepdims=True)
    var = jnp.var(y, axis=(0, 2, 3), keepdims=True)       # biased, as in BN fwd
    yn = (y - mean) / jnp.sqrt(var + eps)
    yn = yn * gamma.reshape(1, -1, 1, 1) + beta.reshape(1, -1, 1, 1)
    return jnp.maximum(yn, 0.0)


if __name__ == "__main__":
    # CNNBlock(in_channels=4, out_channels=8, kernel_size=3, stride=1, padding=0)
    in_channels, out_channels, ksize, stride, padding = 4, 8, 3, 1, 0
    eps = 1e-5

    key = jax.random.PRNGKey(0)
    kx, kw = jax.random.split(key)
    x = jax.random.normal(kx, (2, in_channels, 16, 16), dtype=jnp.float32)
    weight = jax.random.normal(
        kw, (out_channels, in_channels, ksize, ksize), dtype=jnp.float32) * 0.1
    gamma = jnp.ones((out_channels,), jnp.float32)   # BatchNorm2d weight init
    beta = jnp.zeros((out_channels,), jnp.float32)   # BatchNorm2d bias init

    ref = _reference(x, weight, gamma, beta,
                     stride=stride, padding=padding, eps=eps)

    # f32 MXU operands: strict check against the f32 reference.
    out = cnn_block_forward(x, weight, gamma, beta,
                            stride=stride, padding=padding, eps=eps,
                            compute_dtype=jnp.float32)
    out = jax.block_until_ready(out)
    assert out.shape == ref.shape, (out.shape, ref.shape)
    assert jnp.allclose(out, ref, atol=1e-4, rtol=1e-4), \
        float(jnp.max(jnp.abs(out - ref)))

    # bf16 MXU operands (recommended on v6e/v7x), f32 accumulation & elementwise:
    # coarse tolerance accounts only for bf16 operand rounding.
    out_bf16 = jax.block_until_ready(
        cnn_block_forward(x, weight, gamma, beta,
                          stride=stride, padding=padding, eps=eps,
                          compute_dtype=jnp.bfloat16))
    assert jnp.allclose(out_bf16, ref, atol=1e-1, rtol=1e-1), \
        float(jnp.max(jnp.abs(out_bf16 - ref)))

    print("KERNEL_OK")
</pallas_src>

<mosaic_0001>
module attributes {stable_mosaic.version = 11 : i64} {
  func.func @_conv_stats_kernel(%arg0: i32, %arg1: i32, %arg2: memref<8x36xf32, #tpu.memory_space<vmem>>, %arg3: memref<1x36x256xf32, #tpu.memory_space<vmem>>, %arg4: memref<1x8x256xf32, #tpu.memory_space<vmem>>, %arg5: memref<1x1x8x1xf32, #tpu.memory_space<vmem>>, %arg6: memref<1x1x8x1xf32, #tpu.memory_space<vmem>>) attributes {dimension_semantics = [#tpu.dimension_semantics<parallel>, #tpu.dimension_semantics<parallel>], iteration_bounds = array<i64: 2, 1>, scalar_prefetch = 0 : i64, scratch_operands = 0 : i64, tpu.core_type = #tpu.core_type<tc>, window_params = [{pipeline_mode = #tpu.pipeline_mode<synchronous>, transform_indices = @transform_0, window_bounds = array<i64: 8, 36>}, {transform_indices = @transform_1, window_bounds = array<i64: 1, 36, 256>}, {transform_indices = @transform_2, window_bounds = array<i64: 1, 8, 256>}, {transform_indices = @transform_3, window_bounds = array<i64: 1, 1, 8, 1>}, {transform_indices = @transform_4, window_bounds = array<i64: 1, 1, 8, 1>}]} {
    %c0 = arith.constant 0 : index
    %c0_0 = arith.constant 0 : index
    %0 = vector.load %arg2[%c0, %c0_0] : memref<8x36xf32, #tpu.memory_space<vmem>>, vector<8x36xf32>
    %c0_1 = arith.constant 0 : index
    %c0_2 = arith.constant 0 : index
    %c0_3 = arith.constant 0 : index
    %1 = vector.load %arg3[%c0_1, %c0_2, %c0_3] : memref<1x36x256xf32, #tpu.memory_space<vmem>>, vector<1x36x256xf32>
    %2 = vector.shape_cast %1 : vector<1x36x256xf32> to vector<36x256xf32>
    %cst = arith.constant dense<0.000000e+00> : vector<8x256xf32>
    %3 = tpu.matmul %0, %2, %cst {dimension_numbers = #tpu.dot_dimension_numbers<[1], [0], [0], [1], [0, 0, 1, 1], [], []>} : vector<8x36xf32>, vector<36x256xf32>, vector<8x256xf32> -> vector<8x256xf32>
    %c0_4 = arith.constant 0 : index
    %c0_5 = arith.constant 0 : index
    %c0_6 = arith.constant 0 : index
    %4 = vector.load %arg4[%c0_4, %c0_5, %c0_6] : memref<1x8x256xf32, #tpu.memory_space<vmem>>, vector<1x8x256xf32>
    %5 = vector.shape_cast %4 : vector<1x8x256xf32> to vector<8x256xf32>
    %6 = vector.shape_cast %3 : vector<8x256xf32> to vector<1x8x256xf32>
    tpu.vector_store %arg4[%c0_4, %c0_5, %c0_6], %6 {strides = array<i32>} : memref<1x8x256xf32, #tpu.memory_space<vmem>>, vector<1x8x256xf32>,
    %cst_7 = arith.constant dense<0.000000e+00> : vector<8xf32>
    %7 = vector.multi_reduction <add>, %3, %cst_7 [1] : vector<8x256xf32> to vector<8xf32>
    %8 = vector.shape_cast %7 : vector<8xf32> to vector<8x1xf32>
    %c0_8 = arith.constant 0 : index
    %c0_9 = arith.constant 0 : index
    %c0_10 = arith.constant 0 : index
    %c0_11 = arith.constant 0 : index
    %9 = vector.load %arg5[%c0_8, %c0_9, %c0_10, %c0_11] : memref<1x1x8x1xf32, #tpu.memory_space<vmem>>, vector<1x1x8x1xf32>
    %10 = vector.shape_cast %9 : vector<1x1x8x1xf32> to vector<8x1xf32>
    %11 = vector.shape_cast %8 : vector<8x1xf32> to vector<1x1x8x1xf32>
    tpu.vector_store %arg5[%c0_8, %c0_9, %c0_10, %c0_11], %11 {strides = array<i32>} : memref<1x1x8x1xf32, #tpu.memory_space<vmem>>, vector<1x1x8x1xf32>,
    %12 = arith.mulf %3, %3 : vector<8x256xf32>
    %cst_12 = arith.constant dense<0.000000e+00> : vector<8xf32>
    %13 = vector.multi_reduction <add>, %12, %cst_12 [1] : vector<8x256xf32> to vector<8xf32>
    %14 = vector.shape_cast %13 : vector<8xf32> to vector<8x1xf32>
    %c0_13 = arith.constant 0 : index
    %c0_14 = arith.constant 0 : index
    %c0_15 = arith.constant 0 : index
    %c0_16 = arith.constant 0 : index
    %15 = vector.load %arg6[%c0_13, %c0_14, %c0_15, %c0_16] : memref<1x1x8x1xf32, #tpu.memory_space<vmem>>, vector<1x1x8x1xf32>
    %16 = vector.shape_cast %15 : vector<1x1x8x1xf32> to vector<8x1xf32>
    %17 = vector.shape_cast %14 : vector<8x1xf32> to vector<1x1x8x1xf32>
    tpu.vector_store %arg6[%c0_13, %c0_14, %c0_15, %c0_16], %17 {strides = array<i32>} : memref<1x1x8x1xf32, #tpu.memory_space<vmem>>, vector<1x1x8x1xf32>,
    return
  }
  func.func @transform_0(%arg0: i32, %arg1: i32) -> (i32, i32) {
    %c0_i32 = arith.constant 0 : i32
    %c0_i32_0 = arith.constant 0 : i32
    %c0_i32_1 = arith.constant 0 : i32
    return %c0_i32, %c0_i32_0 : i32, i32
  }
  func.func @transform_1(%arg0: i32, %arg1: i32) -> (i32, i32, i32) {
    %c0_i32 = arith.constant 0 : i32
    %c0_i32_0 = arith.constant 0 : i32
    return %arg0, %c0_i32, %arg1 : i32, i32, i32
  }
  func.func @transform_2(%arg0: i32, %arg1: i32) -> (i32, i32, i32) {
    %c0_i32 = arith.constant 0 : i32
    %c0_i32_0 = arith.constant 0 : i32
    return %arg0, %c0_i32, %arg1 : i32, i32, i32
  }
  func.func @transform_3(%arg0: i32, %arg1: i32) -> (i32, i32, i32, i32) {
    %c0_i32 = arith.constant 0 : i32
    %c0_i32_0 = arith.constant 0 : i32
    %c0_i32_1 = arith.constant 0 : i32
    return %arg0, %arg1, %c0_i32, %c0_i32_0 : i32, i32, i32, i32
  }
  func.func @transform_4(%arg0: i32, %arg1: i32) -> (i32, i32, i32, i32) {
    %c0_i32 = arith.constant 0 : i32
    %c0_i32_0 = arith.constant 0 : i32
    %c0_i32_1 = arith.constant 0 : i32
    return %arg0, %arg1, %c0_i32, %c0_i32_0 : i32, i32, i32, i32
  }
}

module attributes {stable_mosaic.version = 11 : i64} {
  func.func @_bn_relu_kernel(%arg0: i32, %arg1: i32, %arg2: memref<1x8x256xf32, #tpu.memory_space<vmem>>, %arg3: memref<8x1xf32, #tpu.memory_space<vmem>>, %arg4: memref<8x1xf32, #tpu.memory_space<vmem>>, %arg5: memref<1x8x256xf32, #tpu.memory_space<vmem>>) attributes {dimension_semantics = [#tpu.dimension_semantics<parallel>, #tpu.dimension_semantics<parallel>], iteration_bounds = array<i64: 2, 1>, scalar_prefetch = 0 : i64, scratch_operands = 0 : i64, tpu.core_type = #tpu.core_type<tc>, window_params = [{transform_indices = @transform_0, window_bounds = array<i64: 1, 8, 256>}, {pipeline_mode = #tpu.pipeline_mode<synchronous>, transform_indices = @transform_1, window_bounds = array<i64: 8, 1>}, {pipeline_mode = #tpu.pipeline_mode<synchronous>, transform_indices = @transform_2, window_bounds = array<i64: 8, 1>}, {transform_indices = @transform_3, window_bounds = array<i64: 1, 8, 256>}]} {
    %c0 = arith.constant 0 : index
    %c0_0 = arith.constant 0 : index
    %c0_1 = arith.constant 0 : index
    %0 = vector.load %arg2[%c0, %c0_0, %c0_1] : memref<1x8x256xf32, #tpu.memory_space<vmem>>, vector<1x8x256xf32>
    %1 = vector.shape_cast %0 : vector<1x8x256xf32> to vector<8x256xf32>
    %c0_2 = arith.constant 0 : index
    %c0_3 = arith.constant 0 : index
    %2 = vector.load %arg3[%c0_2, %c0_3] : memref<8x1xf32, #tpu.memory_space<vmem>>, vector<8x1xf32>
    %3 = vector.broadcast %2 : vector<8x1xf32> to vector<8x256xf32>
    %4 = arith.mulf %1, %3 : vector<8x256xf32>
    %c0_4 = arith.constant 0 : index
    %c0_5 = arith.constant 0 : index
    %5 = vector.load %arg4[%c0_4, %c0_5] : memref<8x1xf32, #tpu.memory_space<vmem>>, vector<8x1xf32>
    %6 = vector.broadcast %5 : vector<8x1xf32> to vector<8x256xf32>
    %7 = arith.addf %4, %6 : vector<8x256xf32>
    %cst = arith.constant 0.000000e+00 : f32
    %8 = vector.broadcast %cst : f32 to vector<8x256xf32>
    %9 = arith.maximumf %7, %8 : vector<8x256xf32>
    %c0_6 = arith.constant 0 : index
    %c0_7 = arith.constant 0 : index
    %c0_8 = arith.constant 0 : index
    %10 = vector.load %arg5[%c0_6, %c0_7, %c0_8] : memref<1x8x256xf32, #tpu.memory_space<vmem>>, vector<1x8x256xf32>
    %11 = vector.shape_cast %10 : vector<1x8x256xf32> to vector<8x256xf32>
    %12 = vector.shape_cast %9 : vector<8x256xf32> to vector<1x8x256xf32>
    tpu.vector_store %arg5[%c0_6, %c0_7, %c0_8], %12 {strides = array<i32>} : memref<1x8x256xf32, #tpu.memory_space<vmem>>, vector<1x8x256xf32>,
    return
  }
  func.func @transform_0(%arg0: i32, %arg1: i32) -> (i32, i32, i32) {
    %c0_i32 = arith.constant 0 : i32
    %c0_i32_0 = arith.constant 0 : i32
    return %arg0, %c0_i32, %arg1 : i32, i32, i32
  }
  func.func @transform_1(%arg0: i32, %arg1: i32) -> (i32, i32) {
    %c0_i32 = arith.constant 0 : i32
    %c0_i32_0 = arith.constant 0 : i32
    %c0_i32_1 = arith.constant 0 : i32
    return %c0_i32, %c0_i32_0 : i32, i32
  }
  func.func @transform_2(%arg0: i32, %arg1: i32) -> (i32, i32) {
    %c0_i32 = arith.constant 0 : i32
    %c0_i32_0 = arith.constant 0 : i32
    %c0_i32_1 = arith.constant 0 : i32
    return %c0_i32, %c0_i32_0 : i32, i32
  }
  func.func @transform_3(%arg0: i32, %arg1: i32) -> (i32, i32, i32) {
    %c0_i32 = arith.constant 0 : i32
    %c0_i32_0 = arith.constant 0 : i32
    return %arg0, %c0_i32, %arg1 : i32, i32, i32
  }
}

</mosaic_0001>

<llo_original>
// kernel: cnn_block_forward.3
$region0: #{cnn_block_forward.3}
  #allocation0 [shape = 'u32[]', space=smem, size = 0x4, offset = 0x4, fixed_abs, tag = 'smem constant byte address 0x4 - core index']
  #allocation1 [shape = 'u32[72,128]{1,0:T(1,128)}', space=vmem, size = 0x9000, scoped, tag = 'internal scratch']
  %s0 = inlined_call_operand.vmem [shape: f32[2,8,256], index: 0, kind: input, shape index: {}, may-alias: {0,3}]
  %s1 = inlined_call_operand.vmem [shape: f32[8,1], index: 1, kind: input, shape index: {}]
  %s2 = inlined_call_operand.vmem [shape: f32[8,1], index: 2, kind: input, shape index: {}]
  %s3 = inlined_call_operand.vmem [shape: f32[2,8,256], index: 3, kind: output, shape index: {}, may-alias: {0,3}]
  %s4 = sld [smem:[#allocation0]]
  $region45: #{cnn_block_forward.3} parent=0
    _
  %s6 = ssub.s32 1, %s4
  %s7 = scalar_select 0, %s6, %s4
  loop: start=0, step=1, limit=4
  $region2: #{cnn_block_forward.3} parent=0 // loop_pre_header
    _
  $region3: #{cnn_block_forward.3} parent=0 // loop_header
    %s9 = sphi 0, %s13
    %p10 = scmp.ge.s32.totalorder %s9, 4
    %s16 = sphi 0, %s28
    %s17 = sphi 0, %s24
    %s18 = sphi 0, %s16
    %s19 = sphi 0, %s17
    %s20 = sphi 0, %s18
    %s21 = sphi 0, %s19
    %s33 = sphi 0, %s35
    %s36 = sphi 0, %s33
    %s37 = sphi 0, %s36
    %s53 = sphi 0, %s37
    %s57 = sphi 0, %s57
    %s59 = sphi 0, %s57
    %s60 = sphi 0, %s59
    %s74 = sphi 0, %s60
    %s78 = sphi 0, %s78
    %s80 = sphi 0, %s78
    %s81 = sphi 0, %s80
    %s95 = sphi 0, %s81
    %s103 = sphi 0, %s105
    %s106 = sphi 0, %s103
    %s107 = sphi 0, %s106
    %s123 = sphi 0, %s107
  $region4: #{cnn_block_forward.3} parent=0 // loop_header_branch
    %12 = sbr.rel (%p10) target = $region8
  $region5: #{cnn_block_forward.3} parent=0 // loop_body
    %s14 = ssub.s32 %s9, 1
    %s15 = ssub.s32 %s9, 2
    %s22 = sadd.s32 1, %s17
    %p23 = scmp.ge.s32.totalorder %s22, 1
    %s24 = scalar_select %p23, 0, %s22
    %s25 = sadd.s32 1, %s16
    %s26 = scalar_select %p23, %s25, %s16
    %p27 = scmp.ge.s32.totalorder %s26, 2
    %s28 = scalar_select %p27, 0, %s26
    %s29 = ssub.s32 %s16, %s28
    %s30 = ssub.s32 %s17, %s24
    %s31 = sor.u32 %s29, %s30
    %p32 = scmp.eq.s32.totalorder %s31, 0
    %s34 = sadd.s32 %s33, 1
    %s35 = scalar_select %p32, %s33, %s34
    %p38 = pneg %p32
    %p39 = scmp.eq.s32.totalorder %s9, 1
    %p40 = por %p38, %p39
    %p41 = scmp.ne.s32.totalorder %s33, %s36
    %p42 = scmp.eq.s32.totalorder %s9, 0
    %p43 = por %p41, %p42
    %p44 = scmp.ne.s32.totalorder %s33, %s36
    %p45 = scmp.eq.s32.totalorder %s14, 1
    %p46 = por %p44, %p45
    %p47 = scmp.ne.s32.totalorder %s36, %s37
    %p48 = scmp.eq.s32.totalorder %s14, 0
    %p49 = por %p47, %p48
    %p50 = scmp.ne.s32.totalorder %s36, %s37
    %p51 = scmp.eq.s32.totalorder %s15, 1
    %p52 = por %p50, %p51
    %p54 = scmp.ne.s32.totalorder %s37, %s53
    %p55 = scmp.eq.s32.totalorder %s15, 0
    %p56 = por %p54, %p55
    %s58 = sadd.s32 %s57, 1
    %p61 = scmp.eq.s32.totalorder %s9, 1
    %p62 = scmp.ne.s32.totalorder %s57, %s59
    %p63 = scmp.eq.s32.totalorder %s9, 0
    %p64 = por %p62, %p63
    %p65 = scmp.ne.s32.totalorder %s57, %s59
    %p66 = scmp.eq.s32.totalorder %s14, 1
    %p67 = por %p65, %p66
    %p68 = scmp.ne.s32.totalorder %s59, %s60
    %p69 = scmp.eq.s32.totalorder %s14, 0
    %p70 = por %p68, %p69
    %p71 = scmp.ne.s32.totalorder %s59, %s60
    %p72 = scmp.eq.s32.totalorder %s15, 1
    %p73 = por %p71, %p72
    %p75 = scmp.ne.s32.totalorder %s60, %s74
    %p76 = scmp.eq.s32.totalorder %s15, 0
    %p77 = por %p75, %p76
    %s79 = sadd.s32 %s78, 1
    %p82 = scmp.eq.s32.totalorder %s9, 1
    %p83 = scmp.ne.s32.totalorder %s78, %s80
    %p84 = scmp.eq.s32.totalorder %s9, 0
    %p85 = por %p83, %p84
    %p86 = scmp.ne.s32.totalorder %s78, %s80
    %p87 = scmp.eq.s32.totalorder %s14, 1
    %p88 = por %p86, %p87
    %p89 = scmp.ne.s32.totalorder %s80, %s81
    %p90 = scmp.eq.s32.totalorder %s14, 0
    %p91 = por %p89, %p90
    %p92 = scmp.ne.s32.totalorder %s80, %s81
    %p93 = scmp.eq.s32.totalorder %s15, 1
    %p94 = por %p92, %p93
    %p96 = scmp.ne.s32.totalorder %s81, %s95
    %p97 = scmp.eq.s32.totalorder %s15, 0
    %p98 = por %p96, %p97
    %s99 = ssub.s32 %s16, %s28
    %s100 = ssub.s32 %s17, %s24
    %s101 = sor.u32 %s99, %s100
    %p102 = scmp.eq.s32.totalorder %s101, 0
    %s104 = sadd.s32 %s103, 1
    %s105 = scalar_select %p102, %s103, %s104
    %p108 = pneg %p102
    %p109 = scmp.eq.s32.totalorder %s9, 1
    %p110 = por %p108, %p109
    %p111 = scmp.ne.s32.totalorder %s103, %s106
    %p112 = scmp.eq.s32.totalorder %s9, 0
    %p113 = por %p111, %p112
    %p114 = scmp.ne.s32.totalorder %s103, %s106
    %p115 = scmp.eq.s32.totalorder %s14, 1
    %p116 = por %p114, %p115
    %p117 = scmp.ne.s32.totalorder %s106, %s107
    %p118 = scmp.eq.s32.totalorder %s14, 0
    %p119 = por %p117, %p118
    %p120 = scmp.ne.s32.totalorder %s106, %s107
    %p121 = scmp.eq.s32.totalorder %s15, 1
    %p122 = por %p120, %p121
    %p124 = scmp.ne.s32.totalorder %s107, %s123
    %p125 = scmp.eq.s32.totalorder %s15, 0
    %p126 = por %p124, %p125
    %p127 = scmp.le.s32.totalorder 1, %s9
    %p128 = scmp.lt.s32.totalorder %s9, 3
    %p129 = pnand %p127, %p128
    %p130 = pneg %p129
    // Predicated region
    $region9: #{cnn_block_forward.3} parent=5 // pred_check
      _
    $region10: #{cnn_block_forward.3} parent=5 // pred_check_branch
      %132 = sbr.rel (%p129) target = $region12
    $region11: #{cnn_block_forward.3} parent=5 // pred_region
      %s133 = ssub.s32 %s9, 1
      // Predicated region
      $region13: #{cnn_block_forward.3} parent=11 // pred_check
        %p134 = pneg %p70
      $region14: #{cnn_block_forward.3} parent=11 // pred_check_branch
        %136 = sbr.rel (%p134) target = $region16
      $region15: #{cnn_block_forward.3} parent=11 // pred_region
        _
      $region16: #{cnn_block_forward.3} parent=11 // pred_fallthru
        _
      // Predicated region
      $region17: #{cnn_block_forward.3} parent=11 // pred_check
        %p137 = pneg %p91
      $region18: #{cnn_block_forward.3} parent=11 // pred_check_branch
        %139 = sbr.rel (%p137) target = $region20
      $region19: #{cnn_block_forward.3} parent=11 // pred_region
        _
      $region20: #{cnn_block_forward.3} parent=11 // pred_fallthru
        _
    $region12: #{cnn_block_forward.3} parent=5 // pred_fallthru
      _
    %p140 = scmp.lt.s32.totalorder %s9, 2
    // Predicated region
    $region21: #{cnn_block_forward.3} parent=5 // pred_check
      %p141 = pneg %p140
    $region22: #{cnn_block_forward.3} parent=5 // pred_check_branch
      %143 = sbr.rel (%p141) target = $region24
    $region23: #{cnn_block_forward.3} parent=5 // pred_region
      // Predicated region
      $region25: #{cnn_block_forward.3} parent=23 // pred_check
        %p144 = pneg %p43
      $region26: #{cnn_block_forward.3} parent=23 // pred_check_branch
        %146 = sbr.rel (%p144) target = $region28
      $region27: #{cnn_block_forward.3} parent=23 // pred_region
        %s147 = smul.u32 2, %s17
        %p148 = scmp.lt.s32.totalorder %s16, 1
        %s149 = scalar_select %p148, %s16, 1
        %p150 = scmp.lt.s32.totalorder %s147, 1
        %s151 = scalar_select %p150, %s147, 1
        %s152 = smul.addr %s149, 2
        %s153 = sadd.s32 %s151, %s152
        %s154 = smul.addr %s153, 8
        %s155 = scalar_lea.vmem %s0, %s154
        %s156 = smul.u32 2, %s17
      $region28: #{cnn_block_forward.3} parent=23 // pred_fallthru
        _
    $region24: #{cnn_block_forward.3} parent=5 // pred_fallthru
      _
    %p157 = scmp.le.s32.totalorder 1, %s9
    %p158 = scmp.lt.s32.totalorder %s9, 3
    %p159 = pnand %p157, %p158
    %p160 = pneg %p159
    // Predicated region
    $region29: #{cnn_block_forward.3} parent=5 // pred_check
      _
    $region30: #{cnn_block_forward.3} parent=5 // pred_check_branch
      %162 = sbr.rel (%p159) target = $region32
    $region31: #{cnn_block_forward.3} parent=5 // pred_region
      %s163 = ssub.s32 %s9, 1
      %s164 = smul.u32 2, %s19
      %p165 = scmp.lt.s32.totalorder %s18, 1
      %s166 = scalar_select %p165, %s18, 1
      %p167 = scmp.lt.s32.totalorder %s164, 1
      %s168 = scalar_select %p167, %s164, 1
      %s169 = smul.addr %s166, 2
      %s170 = sadd.s32 %s168, %s169
      %s171 = smul.addr %s170, 8
      %s172 = scalar_lea.vmem %s0, %s171
      %p173 = pneg %p49
      %p174 = pneg %p46
      %p175 = pneg %p70
      %p176 = pneg %p67
      %p177 = pneg %p91
      %p178 = pneg %p88
      %p179 = pneg %p119
      %p180 = pneg %p116
      %s181 = smul.u32 2, %s19
      %p182 = scmp.lt.s32.totalorder %s18, 1
      %s183 = scalar_select %p182, %s18, 1
      %p184 = scmp.lt.s32.totalorder %s181, 1
      %s185 = scalar_select %p184, %s181, 1
      %s186 = smul.addr %s183, 2
      %s187 = sadd.s32 %s185, %s186
      %s188 = smul.addr %s187, 8
      %s189 = scalar_lea.vmem %s3, %s188
      %s190 = smul.u32 2, %s19
      %p191 = scmp.lt.s32.totalorder %s18, 1
      %s192 = scalar_select %p191, %s18, 1
      %p193 = scmp.lt.s32.totalorder %s190, 1
      %s194 = scalar_select %p193, %s190, 1
      %s195 = smul.addr %s192, 2
      %s196 = sadd.s32 %s194, %s195
      %s197 = smul.addr %s196, 8
      %s198 = scalar_lea.vmem %s0, %s197
      %s199 = smul.u32 2, %s19
      %s200 = smul.u32 2, %s19
      %p201 = scmp.lt.s32.totalorder %s18, 1
      %s202 = scalar_select %p201, %s18, 1
      %p203 = scmp.lt.s32.totalorder %s200, 1
      %s204 = scalar_select %p203, %s200, 1
      %s205 = smul.addr %s202, 2
      %s206 = sadd.s32 %s204, %s205
      %s207 = smul.addr %s206, 8
      %s208 = scalar_lea.vmem %s3, %s207
      %s209 = smul.u32 2, %s19
      %v210 = vld [vmem:[%s198] sm:$0xff]
      %v211 = vld [vmem:[%s198 + $0x8] sm:$0xff]
      %v212 = vld [vmem:[%s1] sm:$0xff]
      %214 = vset.pattern.permute.xlu0 0
      %215 = vperm.xlu0 %214, %v212
      %v216 = vpop.permute.xlu0 %215
      %v218 = vmul.f32 %v210, %v216
      %v219 = vmul.f32 %v211, %v216
      %v220 = vld [vmem:[%s2] sm:$0xff]
      %222 = vset.pattern.permute.xlu0 0
      %223 = vperm.xlu0 %222, %v220
      %v224 = vpop.permute.xlu0 %223
      %v226 = vadd.f32 %v218, %v224
      %v227 = vadd.f32 %v219, %v224
      %v228 = vmax.f32 %v226, 0.0
      %v229 = vmax.f32 %v227, 0.0
      %230 = vst [vmem:[%s208] sm:$0xff] %v228
      %231 = vst [vmem:[%s208 + $0x8] sm:$0xff] %v229
      %s232 = smul.u32 2, %s19
      %p233 = scmp.lt.s32.totalorder %s18, 1
      %s234 = scalar_select %p233, %s18, 1
      %p235 = scmp.lt.s32.totalorder %s232, 1
      %s236 = scalar_select %p235, %s232, 1
      %s237 = smul.addr %s234, 2
      %s238 = sadd.s32 %s236, %s237
      %s239 = smul.addr %s238, 8
      %s240 = scalar_lea.vmem %s3, %s239
      // Predicated region
      $region33: #{cnn_block_forward.3} parent=31 // pred_check
        %p241 = pneg %p116
      $region34: #{cnn_block_forward.3} parent=31 // pred_check_branch
        %243 = sbr.rel (%p241) target = $region36
      $region35: #{cnn_block_forward.3} parent=31 // pred_region
        %s244 = smul.u32 2, %s19
      $region36: #{cnn_block_forward.3} parent=31 // pred_fallthru
        _
    $region32: #{cnn_block_forward.3} parent=5 // pred_fallthru
      _
    %p245 = scmp.le.s32.totalorder 2, %s9
    // Predicated region
    $region37: #{cnn_block_forward.3} parent=5 // pred_check
      %p246 = pneg %p245
    $region38: #{cnn_block_forward.3} parent=5 // pred_check_branch
      %248 = sbr.rel (%p246) target = $region40
    $region39: #{cnn_block_forward.3} parent=5 // pred_region
      %s249 = ssub.s32 %s9, 2
      // Predicated region
      $region41: #{cnn_block_forward.3} parent=39 // pred_check
        %p250 = pneg %p122
      $region42: #{cnn_block_forward.3} parent=39 // pred_check_branch
        %252 = sbr.rel (%p250) target = $region44
      $region43: #{cnn_block_forward.3} parent=39 // pred_region
        %s253 = smul.u32 2, %s21
        %p254 = scmp.lt.s32.totalorder %s20, 1
        %s255 = scalar_select %p254, %s20, 1
        %p256 = scmp.lt.s32.totalorder %s253, 1
        %s257 = scalar_select %p256, %s253, 1
        %s258 = smul.addr %s255, 2
        %s259 = sadd.s32 %s257, %s258
        %s260 = smul.addr %s259, 8
        %s261 = scalar_lea.vmem %s3, %s260
      $region44: #{cnn_block_forward.3} parent=39 // pred_fallthru
        _
    $region40: #{cnn_block_forward.3} parent=5 // pred_fallthru
      _
  $region6: #{cnn_block_forward.3} parent=0 // loop_footer
    %s13 = sadd.s32 1, %s9
  $region7: #{cnn_block_forward.3} parent=0 // loop_footer_branch
    %8 = sbr.rel target = $region3
  $region8: #{cnn_block_forward.3} parent=0 // loop_exit
    _

// kernel: cnn_block_forward.2
$region0: #{cnn_block_forward.2}
  #allocation0 [shape = 'u32[]', space=smem, size = 0x4, offset = 0x4, fixed_abs, tag = 'smem constant byte address 0x4 - core index']
  #allocation1 [shape = 'u32[72,128]{1,0:T(1,128)}', space=vmem, size = 0x9000, scoped, tag = 'internal scratch']
  %s0 = inlined_call_operand.vmem [shape: f32[8,36], index: 0, kind: input, shape index: {}]
  %s1 = inlined_call_operand.vmem [shape: f32[2,36,256], index: 1, kind: input, shape index: {}]
  %s2 = inlined_call_operand.vmem [shape: f32[2,8,256], index: 2, kind: output, shape index: {0}]
  %s3 = inlined_call_operand.vmem [shape: f32[2,1,8,1], index: 3, kind: output, shape index: {1}]
  %s4 = inlined_call_operand.vmem [shape: f32[2,1,8,1], index: 4, kind: output, shape index: {2}]
  %5 = xla_tuple %s2, %s3, %s4
  %s6 = sld [smem:[#allocation0]]
  $region57: #{cnn_block_forward.2} parent=0
    _
  %s8 = ssub.s32 1, %s6
  %s9 = scalar_select 0, %s8, %s6
  loop: start=0, step=1, limit=4
  $region2: #{cnn_block_forward.2} parent=0 // loop_pre_header
    _
  $region3: #{cnn_block_forward.2} parent=0 // loop_header
    %s11 = sphi 0, %s15
    %p12 = scmp.ge.s32.totalorder %s11, 4
    %s18 = sphi 0, %s30
    %s19 = sphi 0, %s26
    %s20 = sphi 0, %s18
    %s21 = sphi 0, %s19
    %s22 = sphi 0, %s20
    %s23 = sphi 0, %s21
    %s31 = sphi 0, %s31
    %s33 = sphi 0, %s31
    %s34 = sphi 0, %s33
    %s48 = sphi 0, %s34
    %s56 = sphi 0, %s58
    %s59 = sphi 0, %s56
    %s60 = sphi 0, %s59
    %s76 = sphi 0, %s60
    %s84 = sphi 0, %s86
    %s87 = sphi 0, %s84
    %s88 = sphi 0, %s87
    %s104 = sphi 0, %s88
    %s112 = sphi 0, %s114
    %s115 = sphi 0, %s112
    %s116 = sphi 0, %s115
    %s132 = sphi 0, %s116
    %s140 = sphi 0, %s142
    %s143 = sphi 0, %s140
    %s144 = sphi 0, %s143
    %s160 = sphi 0, %s144
  $region4: #{cnn_block_forward.2} parent=0 // loop_header_branch
    %14 = sbr.rel (%p12) target = $region8
  $region5: #{cnn_block_forward.2} parent=0 // loop_body
    %s16 = ssub.s32 %s11, 1
    %s17 = ssub.s32 %s11, 2
    %s24 = sadd.s32 1, %s19
    %p25 = scmp.ge.s32.totalorder %s24, 1
    %s26 = scalar_select %p25, 0, %s24
    %s27 = sadd.s32 1, %s18
    %s28 = scalar_select %p25, %s27, %s18
    %p29 = scmp.ge.s32.totalorder %s28, 2
    %s30 = scalar_select %p29, 0, %s28
    %s32 = sadd.s32 %s31, 1
    %p35 = scmp.eq.s32.totalorder %s11, 1
    %p36 = scmp.ne.s32.totalorder %s31, %s33
    %p37 = scmp.eq.s32.totalorder %s11, 0
    %p38 = por %p36, %p37
    %p39 = scmp.ne.s32.totalorder %s31, %s33
    %p40 = scmp.eq.s32.totalorder %s16, 1
    %p41 = por %p39, %p40
    %p42 = scmp.ne.s32.totalorder %s33, %s34
    %p43 = scmp.eq.s32.totalorder %s16, 0
    %p44 = por %p42, %p43
    %p45 = scmp.ne.s32.totalorder %s33, %s34
    %p46 = scmp.eq.s32.totalorder %s17, 1
    %p47 = por %p45, %p46
    %p49 = scmp.ne.s32.totalorder %s34, %s48
    %p50 = scmp.eq.s32.totalorder %s17, 0
    %p51 = por %p49, %p50
    %s52 = ssub.s32 %s18, %s30
    %s53 = ssub.s32 %s19, %s26
    %s54 = sor.u32 %s52, %s53
    %p55 = scmp.eq.s32.totalorder %s54, 0
    %s57 = sadd.s32 %s56, 1
    %s58 = scalar_select %p55, %s56, %s57
    %p61 = pneg %p55
    %p62 = scmp.eq.s32.totalorder %s11, 1
    %p63 = por %p61, %p62
    %p64 = scmp.ne.s32.totalorder %s56, %s59
    %p65 = scmp.eq.s32.totalorder %s11, 0
    %p66 = por %p64, %p65
    %p67 = scmp.ne.s32.totalorder %s56, %s59
    %p68 = scmp.eq.s32.totalorder %s16, 1
    %p69 = por %p67, %p68
    %p70 = scmp.ne.s32.totalorder %s59, %s60
    %p71 = scmp.eq.s32.totalorder %s16, 0
    %p72 = por %p70, %p71
    %p73 = scmp.ne.s32.totalorder %s59, %s60
    %p74 = scmp.eq.s32.totalorder %s17, 1
    %p75 = por %p73, %p74
    %p77 = scmp.ne.s32.totalorder %s60, %s76
    %p78 = scmp.eq.s32.totalorder %s17, 0
    %p79 = por %p77, %p78
    %s80 = ssub.s32 %s18, %s30
    %s81 = ssub.s32 %s19, %s26
    %s82 = sor.u32 %s80, %s81
    %p83 = scmp.eq.s32.totalorder %s82, 0
    %s85 = sadd.s32 %s84, 1
    %s86 = scalar_select %p83, %s84, %s85
    %p89 = pneg %p83
    %p90 = scmp.eq.s32.totalorder %s11, 1
    %p91 = por %p89, %p90
    %p92 = scmp.ne.s32.totalorder %s84, %s87
    %p93 = scmp.eq.s32.totalorder %s11, 0
    %p94 = por %p92, %p93
    %p95 = scmp.ne.s32.totalorder %s84, %s87
    %p96 = scmp.eq.s32.totalorder %s16, 1
    %p97 = por %p95, %p96
    %p98 = scmp.ne.s32.totalorder %s87, %s88
    %p99 = scmp.eq.s32.totalorder %s16, 0
    %p100 = por %p98, %p99
    %p101 = scmp.ne.s32.totalorder %s87, %s88
    %p102 = scmp.eq.s32.totalorder %s17, 1
    %p103 = por %p101, %p102
    %p105 = scmp.ne.s32.totalorder %s88, %s104
    %p106 = scmp.eq.s32.totalorder %s17, 0
    %p107 = por %p105, %p106
    %s108 = ssub.s32 %s18, %s30
    %s109 = ssub.s32 %s19, %s26
    %s110 = sor.u32 %s108, %s109
    %p111 = scmp.eq.s32.totalorder %s110, 0
    %s113 = sadd.s32 %s112, 1
    %s114 = scalar_select %p111, %s112, %s113
    %p117 = pneg %p111
    %p118 = scmp.eq.s32.totalorder %s11, 1
    %p119 = por %p117, %p118
    %p120 = scmp.ne.s32.totalorder %s112, %s115
    %p121 = scmp.eq.s32.totalorder %s11, 0
    %p122 = por %p120, %p121
    %p123 = scmp.ne.s32.totalorder %s112, %s115
    %p124 = scmp.eq.s32.totalorder %s16, 1
    %p125 = por %p123, %p124
    %p126 = scmp.ne.s32.totalorder %s115, %s116
    %p127 = scmp.eq.s32.totalorder %s16, 0
    %p128 = por %p126, %p127
    %p129 = scmp.ne.s32.totalorder %s115, %s116
    %p130 = scmp.eq.s32.totalorder %s17, 1
    %p131 = por %p129, %p130
    %p133 = scmp.ne.s32.totalorder %s116, %s132
    %p134 = scmp.eq.s32.totalorder %s17, 0
    %p135 = por %p133, %p134
    %s136 = ssub.s32 %s18, %s30
    %s137 = ssub.s32 %s19, %s26
    %s138 = sor.u32 %s136, %s137
    %p139 = scmp.eq.s32.totalorder %s138, 0
    %s141 = sadd.s32 %s140, 1
    %s142 = scalar_select %p139, %s140, %s141
    %p145 = pneg %p139
    %p146 = scmp.eq.s32.totalorder %s11, 1
    %p147 = por %p145, %p146
    %p148 = scmp.ne.s32.totalorder %s140, %s143
    %p149 = scmp.eq.s32.totalorder %s11, 0
    %p150 = por %p148, %p149
    %p151 = scmp.ne.s32.totalorder %s140, %s143
    %p152 = scmp.eq.s32.totalorder %s16, 1
    %p153 = por %p151, %p152
    %p154 = scmp.ne.s32.totalorder %s143, %s144
    %p155 = scmp.eq.s32.totalorder %s16, 0
    %p156 = por %p154, %p155
    %p157 = scmp.ne.s32.totalorder %s143, %s144
    %p158 = scmp.eq.s32.totalorder %s17, 1
    %p159 = por %p157, %p158
    %p161 = scmp.ne.s32.totalorder %s144, %s160
    %p162 = scmp.eq.s32.totalorder %s17, 0
    %p163 = por %p161, %p162
    %p164 = scmp.le.s32.totalorder 1, %s11
    %p165 = scmp.lt.s32.totalorder %s11, 3
    %p166 = pnand %p164, %p165
    %p167 = pneg %p166
    // Predicated region
    $region9: #{cnn_block_forward.2} parent=5 // pred_check
      _
    $region10: #{cnn_block_forward.2} parent=5 // pred_check_branch
      %169 = sbr.rel (%p166) target = $region12
    $region11: #{cnn_block_forward.2} parent=5 // pred_region
      %s170 = ssub.s32 %s11, 1
      // Predicated region
      $region13: #{cnn_block_forward.2} parent=11 // pred_check
        %p171 = pneg %p44
      $region14: #{cnn_block_forward.2} parent=11 // pred_check_branch
        %173 = sbr.rel (%p171) target = $region16
      $region15: #{cnn_block_forward.2} parent=11 // pred_region
        _
      $region16: #{cnn_block_forward.2} parent=11 // pred_fallthru
        _
    $region12: #{cnn_block_forward.2} parent=5 // pred_fallthru
      _
    %p174 = scmp.lt.s32.totalorder %s11, 2
    // Predicated region
    $region17: #{cnn_block_forward.2} parent=5 // pred_check
      %p175 = pneg %p174
    $region18: #{cnn_block_forward.2} parent=5 // pred_check_branch
      %177 = sbr.rel (%p175) target = $region20
    $region19: #{cnn_block_forward.2} parent=5 // pred_region
      // Predicated region
      $region21: #{cnn_block_forward.2} parent=19 // pred_check
        %p178 = pneg %p66
      $region22: #{cnn_block_forward.2} parent=19 // pred_check_branch
        %180 = sbr.rel (%p178) target = $region24
      $region23: #{cnn_block_forward.2} parent=19 // pred_region
        %s181 = smul.u32 2, %s19
        %p182 = scmp.lt.s32.totalorder %s18, 1
        %s183 = scalar_select %p182, %s18, 1
        %p184 = scmp.lt.s32.totalorder %s181, 1
        %s185 = scalar_select %p184, %s181, 1
        %s186 = smul.addr %s183, 10
        %s187 = sadd.s32 %s185, %s186
        %s188 = smul.addr %s187, 8
        %s189 = scalar_lea.vmem %s1, %s188
        %s190 = smul.u32 2, %s19
      $region24: #{cnn_block_forward.2} parent=19 // pred_fallthru
        _
    $region20: #{cnn_block_forward.2} parent=5 // pred_fallthru
      _
    %p191 = scmp.le.s32.totalorder 1, %s11
    %p192 = scmp.lt.s32.totalorder %s11, 3
    %p193 = pnand %p191, %p192
    %p194 = pneg %p193
    // Predicated region
    $region25: #{cnn_block_forward.2} parent=5 // pred_check
      _
    $region26: #{cnn_block_forward.2} parent=5 // pred_check_branch
      %196 = sbr.rel (%p193) target = $region28
    $region27: #{cnn_block_forward.2} parent=5 // pred_region
      %s197 = ssub.s32 %s11, 1
      %p198 = pneg %p44
      %p199 = pneg %p41
      %s200 = smul.u32 2, %s21
      %p201 = scmp.lt.s32.totalorder %s20, 1
      %s202 = scalar_select %p201, %s20, 1
      %p203 = scmp.lt.s32.totalorder %s200, 1
      %s204 = scalar_select %p203, %s200, 1
      %s205 = smul.addr %s202, 10
      %s206 = sadd.s32 %s204, %s205
      %s207 = smul.addr %s206, 8
      %s208 = scalar_lea.vmem %s1, %s207
      %p209 = pneg %p72
      %p210 = pneg %p69
      %p211 = pneg %p100
      %p212 = pneg %p97
      %s213 = smul.u32 2, %s21
      %p214 = scmp.lt.s32.totalorder %s20, 1
      %s215 = scalar_select %p214, %s20, 1
      %p216 = scmp.lt.s32.totalorder %s213, 1
      %s217 = scalar_select %p216, %s213, 1
      %s218 = smul.addr %s215, 2
      %s219 = sadd.s32 %s217, %s218
      %s220 = smul.addr %s219, 8
      %s221 = scalar_lea.vmem %s2, %s220
      %p222 = pneg %p128
      %p223 = pneg %p125
      %p224 = scmp.lt.s32.totalorder %s20, 1
      %s225 = scalar_select %p224, %s20, 1
      %p226 = scmp.lt.s32.totalorder %s21, 0
      %s227 = scalar_select %p226, %s21, 0
      %s228 = sadd.s32 %s227, %s225
      %s229 = smul.addr %s228, 8
      %s230 = scalar_lea.vmem %s3, %s229
      %p231 = pneg %p156
      %p232 = pneg %p153
      %p233 = scmp.lt.s32.totalorder %s20, 1
      %s234 = scalar_select %p233, %s20, 1
      %p235 = scmp.lt.s32.totalorder %s21, 0
      %s236 = scalar_select %p235, %s21, 0
      %s237 = sadd.s32 %s236, %s234
      %s238 = smul.addr %s237, 8
      %s239 = scalar_lea.vmem %s4, %s238
      %s240 = smul.u32 2, %s21
      %p241 = scmp.lt.s32.totalorder %s20, 1
      %s242 = scalar_select %p241, %s20, 1
      %p243 = scmp.lt.s32.totalorder %s240, 1
      %s244 = scalar_select %p243, %s240, 1
      %s245 = smul.addr %s242, 10
      %s246 = sadd.s32 %s244, %s245
      %s247 = smul.addr %s246, 8
      %s248 = scalar_lea.vmem %s1, %s247
      %s249 = smul.u32 2, %s21
      %s250 = smul.u32 2, %s21
      %p251 = scmp.lt.s32.totalorder %s20, 1
      %s252 = scalar_select %p251, %s20, 1
      %p253 = scmp.lt.s32.totalorder %s250, 1
      %s254 = scalar_select %p253, %s250, 1
      %s255 = smul.addr %s252, 2
      %s256 = sadd.s32 %s254, %s255
      %s257 = smul.addr %s256, 8
      %s258 = scalar_lea.vmem %s2, %s257
      %s259 = smul.u32 2, %s21
      %p260 = scmp.lt.s32.totalorder %s20, 1
      %s261 = scalar_select %p260, %s20, 1
      %p262 = scmp.lt.s32.totalorder %s21, 0
      %s263 = scalar_select %p262, %s21, 0
      %s264 = sadd.s32 %s263, %s261
      %s265 = smul.addr %s264, 8
      %s266 = scalar_lea.vmem %s3, %s265
      %p267 = scmp.lt.s32.totalorder %s20, 1
      %s268 = scalar_select %p267, %s20, 1
      %p269 = scmp.lt.s32.totalorder %s21, 0
      %s270 = scalar_select %p269, %s21, 0
      %s271 = sadd.s32 %s270, %s268
      %s272 = smul.addr %s271, 8
      %s273 = scalar_lea.vmem %s4, %s272
      %v274 = vld [vmem:[%s0] sm:$0xff]
      %v275 = vld [vmem:[%s248] sm:$0xff]
      %v276 = vld [vmem:[%s248 + $0x8] sm:$0xff]
      %v277 = vld [vmem:[%s248 + $0x10] sm:$0xff]
      %v278 = vld [vmem:[%s248 + $0x18] sm:$0xff]
      %v279 = vld [vmem:[%s248 + $0x20] sm:$0xff]
      %v280 = vld [vmem:[%s248 + $0x28] sm:$0xff]
      %v281 = vld [vmem:[%s248 + $0x30] sm:$0xff]
      %v282 = vld [vmem:[%s248 + $0x38] sm:$0xff]
      %v283 = vld [vmem:[%s248 + $0x40] sm:$0xf]
      %v284 = vld [vmem:[%s248 + $0x48] sm:$0xf]
      %vm285 = vcmask 293888
      %v287 = vsel %vm285, %v274, 0
      %vm289 = vcmask 1043456
      %v291 = vsel %vm289, %v283, 0
      %v294 = vsel %vm289, %v284, 0
      %296 = vmatpush.msra.mxu0 0.0
      %297 = vmatpush.msra.mxu0 0.0
      %298 = vmatpush.msra.mxu0 0.0
      %299 = vmatpush.msra.mxu0 0.0
      %300 = vmatpush.msra.mxu0 0.0
      %301 = vmatpush.msra.mxu0 0.0
      %302 = vmatpush.msra.mxu0 0.0
      %303 = vmatpush.msra.mxu0 0.0
      %304 = vmatpush.msra.mxu0 0.0
      %305 = vmatpush.msra.mxu0 0.0
      %306 = vmatpush.msra.mxu0 0.0
      %307 = vmatpush.msra.mxu0 %v291
      %308 = vmatpush.msra.mxu0 %v281
      %309 = vmatpush.msra.mxu0 %v279
      %310 = vmatpush.msra.mxu0 %v277
      %311 = vmatpush.msra.mxu0 %v275
      %312 = vmatmul.f32.gmra.mxu0 %v287
      %v313 = vpop.f32.mrf.mxu0
      %v314 = vadd.f32 0.0, %v313
      %315 = vdwg.mxu0
      %316 = vmatpush.msra.mxu0 0.0
      %317 = vmatpush.msra.mxu0 0.0
      %318 = vmatpush.msra.mxu0 0.0
      %319 = vmatpush.msra.mxu0 0.0
      %320 = vmatpush.msra.mxu0 0.0
      %321 = vmatpush.msra.mxu0 0.0
      %322 = vmatpush.msra.mxu0 0.0
      %323 = vmatpush.msra.mxu0 0.0
      %324 = vmatpush.msra.mxu0 0.0
      %325 = vmatpush.msra.mxu0 0.0
      %326 = vmatpush.msra.mxu0 0.0
      %327 = vmatpush.msra.mxu0 %v294
      %328 = vmatpush.msra.mxu0 %v282
      %329 = vmatpush.msra.mxu0 %v280
      %330 = vmatpush.msra.mxu0 %v278
      %331 = vmatpush.msra.mxu0 %v276
      %332 = vmatmul.f32.gmra.mxu0 %v287
      %v333 = vpop.f32.mrf.mxu0
      %v334 = vadd.f32 0.0, %v333
      %335 = vdwg.mxu0
      %336 = vst [vmem:[%s258] sm:$0xff] %v314
      %337 = vst [vmem:[%s258 + $0x8] sm:$0xff] %v334
      %v338 = vadd.f32 %v314, %v334
      %339 = vadd.xlane.f32.xlu0 %v338
      %v340 = vpop.xlane.xlu0 %339
      %vm341 = vcmask 7168
      %342 = vst.msk [vmem:[%s266] sm:$0xff] %vm341, %v340
      %v343 = vmul.f32 %v314, %v314
      %v344 = vmul.f32 %v334, %v334
      %v345 = vadd.f32 %v343, %v344
      %346 = vadd.xlane.f32.xlu0 %v345
      %v347 = vpop.xlane.xlu0 %346
      %348 = vst.msk [vmem:[%s273] sm:$0xff] %vm341, %v347
      %s349 = smul.u32 2, %s21
      %p350 = scmp.lt.s32.totalorder %s20, 1
      %s351 = scalar_select %p350, %s20, 1
      %p352 = scmp.lt.s32.totalorder %s349, 1
      %s353 = scalar_select %p352, %s349, 1
      %s354 = smul.addr %s351, 2
      %s355 = sadd.s32 %s353, %s354
      %s356 = smul.addr %s355, 8
      %s357 = scalar_lea.vmem %s2, %s356
      %p358 = scmp.lt.s32.totalorder %s20, 1
      %s359 = scalar_select %p358, %s20, 1
      %p360 = scmp.lt.s32.totalorder %s21, 0
      %s361 = scalar_select %p360, %s21, 0
      %s362 = sadd.s32 %s361, %s359
      %s363 = smul.addr %s362, 8
      %s364 = scalar_lea.vmem %s3, %s363
      %p365 = scmp.lt.s32.totalorder %s20, 1
      %s366 = scalar_select %p365, %s20, 1
      %p367 = scmp.lt.s32.totalorder %s21, 0
      %s368 = scalar_select %p367, %s21, 0
      %s369 = sadd.s32 %s368, %s366
      %s370 = smul.addr %s369, 8
      %s371 = scalar_lea.vmem %s4, %s370
      // Predicated region
      $region29: #{cnn_block_forward.2} parent=27 // pred_check
        %p372 = pneg %p97
      $region30: #{cnn_block_forward.2} parent=27 // pred_check_branch
        %374 = sbr.rel (%p372) target = $region32
      $region31: #{cnn_block_forward.2} parent=27 // pred_region
        %s375 = smul.u32 2, %s21
      $region32: #{cnn_block_forward.2} parent=27 // pred_fallthru
        _
      // Predicated region
      $region33: #{cnn_block_forward.2} parent=27 // pred_check
        %p376 = pneg %p125
      $region34: #{cnn_block_forward.2} parent=27 // pred_check_branch
        %378 = sbr.rel (%p376) target = $region36
      $region35: #{cnn_block_forward.2} parent=27 // pred_region
        _
      $region36: #{cnn_block_forward.2} parent=27 // pred_fallthru
        _
      // Predicated region
      $region37: #{cnn_block_forward.2} parent=27 // pred_check
        %p379 = pneg %p153
      $region38: #{cnn_block_forward.2} parent=27 // pred_check_branch
        %381 = sbr.rel (%p379) target = $region40
      $region39: #{cnn_block_forward.2} parent=27 // pred_region
        _
      $region40: #{cnn_block_forward.2} parent=27 // pred_fallthru
        _
    $region28: #{cnn_block_forward.2} parent=5 // pred_fallthru
      _
    %p382 = scmp.le.s32.totalorder 2, %s11
    // Predicated region
    $region41: #{cnn_block_forward.2} parent=5 // pred_check
      %p383 = pneg %p382
    $region42: #{cnn_block_forward.2} parent=5 // pred_check_branch
      %385 = sbr.rel (%p383) target = $region44
    $region43: #{cnn_block_forward.2} parent=5 // pred_region
      %s386 = ssub.s32 %s11, 2
      // Predicated region
      $region45: #{cnn_block_forward.2} parent=43 // pred_check
        %p387 = pneg %p103
      $region46: #{cnn_block_forward.2} parent=43 // pred_check_branch
        %389 = sbr.rel (%p387) target = $region48
      $region47: #{cnn_block_forward.2} parent=43 // pred_region
        %s390 = smul.u32 2, %s23
        %p391 = scmp.lt.s32.totalorder %s22, 1
        %s392 = scalar_select %p391, %s22, 1
        %p393 = scmp.lt.s32.totalorder %s390, 1
        %s394 = scalar_select %p393, %s390, 1
        %s395 = smul.addr %s392, 2
        %s396 = sadd.s32 %s394, %s395
        %s397 = smul.addr %s396, 8
        %s398 = scalar_lea.vmem %s2, %s397
      $region48: #{cnn_block_forward.2} parent=43 // pred_fallthru
        _
      // Predicated region
      $region49: #{cnn_block_forward.2} parent=43 // pred_check
        %p399 = pneg %p131
      $region50: #{cnn_block_forward.2} parent=43 // pred_check_branch
        %401 = sbr.rel (%p399) target = $region52
      $region51: #{cnn_block_forward.2} parent=43 // pred_region
        %p402 = scmp.lt.s32.totalorder %s22, 1
        %s403 = scalar_select %p402, %s22, 1
        %p404 = scmp.lt.s32.totalorder %s23, 0
        %s405 = scalar_select %p404, %s23, 0
        %s406 = sadd.s32 %s405, %s403
        %s407 = smul.addr %s406, 8
        %s408 = scalar_lea.vmem %s3, %s407
      $region52: #{cnn_block_forward.2} parent=43 // pred_fallthru
        _
      // Predicated region
      $region53: #{cnn_block_forward.2} parent=43 // pred_check
        %p409 = pneg %p159
      $region54: #{cnn_block_forward.2} parent=43 // pred_check_branch
        %411 = sbr.rel (%p409) target = $region56
      $region55: #{cnn_block_forward.2} parent=43 // pred_region
        %p412 = scmp.lt.s32.totalorder %s22, 1
        %s413 = scalar_select %p412, %s22, 1
        %p414 = scmp.lt.s32.totalorder %s23, 0
        %s415 = scalar_select %p414, %s23, 0
        %s416 = sadd.s32 %s415, %s413
        %s417 = smul.addr %s416, 8
        %s418 = scalar_lea.vmem %s4, %s417
      $region56: #{cnn_block_forward.2} parent=43 // pred_fallthru
        _
    $region44: #{cnn_block_forward.2} parent=5 // pred_fallthru
      _
  $region6: #{cnn_block_forward.2} parent=0 // loop_footer
    %s15 = sadd.s32 1, %s11
  $region7: #{cnn_block_forward.2} parent=0 // loop_footer_branch
    %10 = sbr.rel target = $region3
  $region8: #{cnn_block_forward.2} parent=0 // loop_exit
    _

</llo_original>
